<compile_context>
chip_gen: v6e
topology: v6e:2x2x1
jax: 0.10.0
libtpu: 0.0.40
codegen_flags: <defaults>
</compile_context>

<pallas_src>
import jax
import jax.numpy as jnp
from jax.experimental import pallas as pl
from jax.experimental.pallas import tpu as pltpu


def _round_up(v, m):
    return (v + m - 1) // m * m


def _actor_kernel(x_ref, w1_ref, b1_ref, w2_ref, b2_ref, o_ref):
    # Layer 1: cast x to bf16 on the VPU (hidden under DMA/MXU), MXU matmul
    # with f32 accumulation, bias + ReLU in f32.
    x = x_ref[...].astype(jnp.bfloat16)
    h = jnp.dot(x, w1_ref[...], preferred_element_type=jnp.float32)
    h = jnp.maximum(h + b1_ref[...], 0.0)
    # Layer 2: MXU matmul (bf16 in, f32 accumulate), bias + tanh (EUP) in f32.
    y = jnp.dot(h.astype(jnp.bfloat16), w2_ref[...],
                preferred_element_type=jnp.float32)
    o_ref[...] = jnp.tanh(y + b2_ref[...]).astype(o_ref.dtype)


def prepare_params(w1, b1, w2, b2):
    """One-time parameter layout prep (hoisted out of the per-call path).

    w1 : (dim_state, hidden) f32    b1 : (hidden,) or (1, hidden) f32
    w2 : (hidden, dim_act)  f32     b2 : (dim_act,) or (1, dim_act) f32

    Returns bf16 weights with the hidden dim zero-padded to a multiple of 128
    (exact math: padded hidden cols get bias 0 -> relu(0)=0 -> zero w2 rows)
    and f32 biases shaped (1, n). dim_act is kept UNPADDED.
    """
    dim_state, hidden = w1.shape
    dim_act = w2.shape[1]
    hid_p = _round_up(hidden, 128)
    w1_p = jnp.zeros((dim_state, hid_p), jnp.bfloat16).at[:, :hidden].set(
        w1.astype(jnp.bfloat16))
    b1_p = jnp.zeros((1, hid_p), jnp.float32).at[:, :hidden].set(
        jnp.reshape(b1, (1, hidden)).astype(jnp.float32))
    w2_p = jnp.zeros((hid_p, dim_act), jnp.bfloat16).at[:hidden, :].set(
        w2.astype(jnp.bfloat16))
    b2_p = jnp.reshape(b2, (1, dim_act)).astype(jnp.float32)
    return w1_p, b1_p, w2_p, b2_p


def dummy_actor_forward(x, prepared, *, block_rows=2048, min_pallas_batch=256):
    """Fused forward pass: tanh(relu(x @ w1 + b1) @ w2 + b2).

    x        : (B, dim_state) f32
    prepared : output of prepare_params()
    returns  : (B, dim_act) f32
    """
    w1_p, b1_p, w2_p, b2_p = prepared
    B, dim_state = x.shape
    hid_p = w1_p.shape[1]
    dim_act = w2_p.shape[1]

    if B < min_pallas_batch:
        # Tiny-batch fallback: pallas_call fixed cost exceeds the work here;
        # XLA fuses this into a couple of ops. Same bf16/f32 math as the kernel.
        h = jnp.maximum(
            jnp.dot(x.astype(jnp.bfloat16), w1_p,
                    preferred_element_type=jnp.float32) + b1_p, 0.0)
        y = jnp.dot(h.astype(jnp.bfloat16), w2_p,
                    preferred_element_type=jnp.float32) + b2_p
        return jnp.tanh(y)

    # Batch tile: big enough to amortize ~0.35us/step overhead, but split so
    # grid >= 2 and both v7x TensorCores participate; always a multiple of 16.
    tb = min(block_rows, pl.cdiv(B, 2))
    tb = max(16, _round_up(tb, 16))
    grid = (pl.cdiv(B, tb),)  # partial last block handled by Pallas masking

    return pl.pallas_call(
        _actor_kernel,
        out_shape=jax.ShapeDtypeStruct((B, dim_act), jnp.float32),
        grid=grid,
        in_specs=[
            pl.BlockSpec((tb, dim_state), lambda i: (i, 0)),      # x: tiled over batch
            pl.BlockSpec((dim_state, hid_p), lambda i: (0, 0)),   # w1: VMEM-resident
            pl.BlockSpec((1, hid_p), lambda i: (0, 0)),           # b1: VMEM-resident
            pl.BlockSpec((hid_p, dim_act), lambda i: (0, 0)),     # w2: VMEM-resident
            pl.BlockSpec((1, dim_act), lambda i: (0, 0)),         # b2: VMEM-resident
        ],
        out_specs=pl.BlockSpec((tb, dim_act), lambda i: (i, 0)),  # unpadded writeback
        compiler_params=pltpu.CompilerParams(
            dimension_semantics=("parallel",)),                   # shard batch on v7x
    )(x, w1_p, b1_p, w2_p, b2_p)


def dummy_actor_wrapper_forward(x, prepared, is_training=False):
    """Matches DummyActorWrapper.forward: returns the action dict."""
    action = dummy_actor_forward(x, prepared)
    return {"action": action, "action_wo_noise": action}


def init_params(key, dim_state, dim_act, hidden=64):
    """Deterministic raw f32 params (uniform, a la PyTorch fan-in bound)."""
    k1, k2, k3, k4 = jax.random.split(key, 4)
    bound1 = 1.0 / jnp.sqrt(dim_state)
    bound2 = 1.0 / jnp.sqrt(hidden)
    w1 = jax.random.uniform(k1, (dim_state, hidden), jnp.float32, -bound1, bound1)
    b1 = jax.random.uniform(k2, (hidden,), jnp.float32, -bound1, bound1)
    w2 = jax.random.uniform(k3, (hidden, dim_act), jnp.float32, -bound2, bound2)
    b2 = jax.random.uniform(k4, (dim_act,), jnp.float32, -bound2, bound2)
    return w1, b1, w2, b2


if __name__ == "__main__":
    key = jax.random.PRNGKey(0)
    dim_state, dim_act, hidden = 16, 4, 64

    kx1, kx2, kp = jax.random.split(key, 3)
    w1, b1, w2, b2 = init_params(kp, dim_state, dim_act, hidden)
    prepared = prepare_params(w1, b1, w2, b2)

    # --- Pallas path: batch big enough for the kernel; also exercises the
    #     grid=2 / partial-last-block path (400 rows -> tile 208, 2 steps). ---
    batch = 400
    x = jax.random.normal(kx1, (batch, dim_state), jnp.float32)
    out = jax.block_until_ready(dummy_actor_forward(x, prepared))

    # Reference with the same bf16-input / f32-accumulate math as the kernel.
    xb, w1b, w2b = (a.astype(jnp.bfloat16) for a in (x, w1, w2))
    h_ref = jnp.maximum(
        jnp.dot(xb, w1b, preferred_element_type=jnp.float32)
        + b1.reshape(1, -1), 0.0)
    ref = jnp.tanh(
        jnp.dot(h_ref.astype(jnp.bfloat16), w2b,
                preferred_element_type=jnp.float32) + b2.reshape(1, -1))
    # Full-f32 reference (module semantics), looser tolerance for the bf16 cast.
    ref_f32 = jnp.tanh(
        jnp.maximum(x @ w1 + b1.reshape(1, -1), 0.0) @ w2 + b2.reshape(1, -1))

    assert out.shape == (batch, dim_act)
    assert jnp.allclose(out, ref, atol=1e-3, rtol=1e-3)
    assert jnp.allclose(out, ref_f32, atol=3e-2, rtol=3e-2)

    # --- Wrapper + tiny-batch fallback path (B=8 -> fused jnp, same math). ---
    x_small = jax.random.normal(kx2, (8, dim_state), jnp.float32)
    out_dict = dummy_actor_wrapper_forward(x_small, prepared)
    small = jax.block_until_ready(out_dict["action"])
    small_ref = jnp.tanh(
        jnp.maximum(x_small @ w1 + b1.reshape(1, -1), 0.0) @ w2
        + b2.reshape(1, -1))
    assert small.shape == (8, dim_act)
    assert jnp.allclose(small, small_ref, atol=3e-2, rtol=3e-2)
    assert jnp.array_equal(out_dict["action"], out_dict["action_wo_noise"])

    print("KERNEL_OK")
</pallas_src>

<mosaic_0001>
module attributes {stable_mosaic.version = 11 : i64} {
  func.func @_actor_kernel(%arg0: i32, %arg1: memref<208x16xf32, #tpu.memory_space<vmem>>, %arg2: memref<16x128xbf16, #tpu.memory_space<vmem>>, %arg3: memref<1x128xf32, #tpu.memory_space<vmem>>, %arg4: memref<128x4xbf16, #tpu.memory_space<vmem>>, %arg5: memref<1x4xf32, #tpu.memory_space<vmem>>, %arg6: memref<208x4xf32, #tpu.memory_space<vmem>>) attributes {dimension_semantics = [#tpu.dimension_semantics<parallel>], iteration_bounds = array<i64: 2>, scalar_prefetch = 0 : i64, scratch_operands = 0 : i64, tpu.core_type = #tpu.core_type<tc>, window_params = [{transform_indices = @transform_0, window_bounds = array<i64: 208, 16>}, {pipeline_mode = #tpu.pipeline_mode<synchronous>, transform_indices = @transform_1, window_bounds = array<i64: 16, 128>}, {pipeline_mode = #tpu.pipeline_mode<synchronous>, transform_indices = @transform_2, window_bounds = array<i64: 1, 128>}, {pipeline_mode = #tpu.pipeline_mode<synchronous>, transform_indices = @transform_3, window_bounds = array<i64: 128, 4>}, {pipeline_mode = #tpu.pipeline_mode<synchronous>, transform_indices = @transform_4, window_bounds = array<i64: 1, 4>}, {transform_indices = @transform_5, window_bounds = array<i64: 208, 4>}]} {
    %c0 = arith.constant 0 : index
    %c0_0 = arith.constant 0 : index
    %0 = vector.load %arg1[%c0, %c0_0] : memref<208x16xf32, #tpu.memory_space<vmem>>, vector<208x16xf32>
    %1 = arith.truncf %0 : vector<208x16xf32> to vector<208x16xbf16>
    %c0_1 = arith.constant 0 : index
    %c0_2 = arith.constant 0 : index
    %2 = vector.load %arg2[%c0_1, %c0_2] : memref<16x128xbf16, #tpu.memory_space<vmem>>, vector<16x128xbf16>
    %cst = arith.constant dense<0.000000e+00> : vector<208x128xf32>
    %3 = tpu.matmul %1, %2, %cst {dimension_numbers = #tpu.dot_dimension_numbers<[1], [0], [0], [1], [0, 0, 1, 1], [], []>} : vector<208x16xbf16>, vector<16x128xbf16>, vector<208x128xf32> -> vector<208x128xf32>
    %c0_3 = arith.constant 0 : index
    %c0_4 = arith.constant 0 : index
    %4 = vector.load %arg3[%c0_3, %c0_4] : memref<1x128xf32, #tpu.memory_space<vmem>>, vector<1x128xf32>
    %5 = vector.broadcast %4 : vector<1x128xf32> to vector<208x128xf32>
    %6 = arith.addf %3, %5 : vector<208x128xf32>
    %cst_5 = arith.constant 0.000000e+00 : f32
    %7 = vector.broadcast %cst_5 : f32 to vector<208x128xf32>
    %8 = arith.maximumf %6, %7 : vector<208x128xf32>
    %9 = arith.truncf %8 : vector<208x128xf32> to vector<208x128xbf16>
    %c0_6 = arith.constant 0 : index
    %c0_7 = arith.constant 0 : index
    %10 = vector.load %arg4[%c0_6, %c0_7] : memref<128x4xbf16, #tpu.memory_space<vmem>>, vector<128x4xbf16>
    %cst_8 = arith.constant dense<0.000000e+00> : vector<208x4xf32>
    %11 = tpu.matmul %9, %10, %cst_8 {dimension_numbers = #tpu.dot_dimension_numbers<[1], [0], [0], [1], [0, 0, 1, 1], [], []>} : vector<208x128xbf16>, vector<128x4xbf16>, vector<208x4xf32> -> vector<208x4xf32>
    %c0_9 = arith.constant 0 : index
    %c0_10 = arith.constant 0 : index
    %12 = vector.load %arg5[%c0_9, %c0_10] : memref<1x4xf32, #tpu.memory_space<vmem>>, vector<1x4xf32>
    %13 = vector.broadcast %12 : vector<1x4xf32> to vector<208x4xf32>
    %14 = arith.addf %11, %13 : vector<208x4xf32>
    %15 = math.tanh %14 : vector<208x4xf32>
    %c0_11 = arith.constant 0 : index
    %c0_12 = arith.constant 0 : index
    %16 = vector.load %arg6[%c0_11, %c0_12] : memref<208x4xf32, #tpu.memory_space<vmem>>, vector<208x4xf32>
    tpu.vector_store %arg6[%c0_11, %c0_12], %15 {strides = array<i32>} : memref<208x4xf32, #tpu.memory_space<vmem>>, vector<208x4xf32>,
    return
  }
  func.func @transform_0(%arg0: i32) -> (i32, i32) {
    %c0_i32 = arith.constant 0 : i32
    %c0_i32_0 = arith.constant 0 : i32
    return %arg0, %c0_i32 : i32, i32
  }
  func.func @transform_1(%arg0: i32) -> (i32, i32) {
    %c0_i32 = arith.constant 0 : i32
    %c0_i32_0 = arith.constant 0 : i32
    %c0_i32_1 = arith.constant 0 : i32
    return %c0_i32, %c0_i32_0 : i32, i32
  }
  func.func @transform_2(%arg0: i32) -> (i32, i32) {
    %c0_i32 = arith.constant 0 : i32
    %c0_i32_0 = arith.constant 0 : i32
    %c0_i32_1 = arith.constant 0 : i32
    return %c0_i32, %c0_i32_0 : i32, i32
  }
  func.func @transform_3(%arg0: i32) -> (i32, i32) {
    %c0_i32 = arith.constant 0 : i32
    %c0_i32_0 = arith.constant 0 : i32
    %c0_i32_1 = arith.constant 0 : i32
    return %c0_i32, %c0_i32_0 : i32, i32
  }
  func.func @transform_4(%arg0: i32) -> (i32, i32) {
    %c0_i32 = arith.constant 0 : i32
    %c0_i32_0 = arith.constant 0 : i32
    %c0_i32_1 = arith.constant 0 : i32
    return %c0_i32, %c0_i32_0 : i32, i32
  }
  func.func @transform_5(%arg0: i32) -> (i32, i32) {
    %c0_i32 = arith.constant 0 : i32
    %c0_i32_0 = arith.constant 0 : i32
    return %arg0, %c0_i32 : i32, i32
  }
}

</mosaic_0001>

<llo_original>
// kernel: tpu_custom_call.1
$region0: #{tpu_custom_call.1}
  #allocation0 [shape = 'u32[]', space=smem, size = 0x4, offset = 0x4, fixed_abs, tag = 'smem constant byte address 0x4 - core index']
  #allocation1 [shape = 'u32[144,128]{1,0:T(1,128)}', space=vmem, size = 0x12000, scoped, tag = 'internal scratch']
  %s0 = inlined_call_operand.vmem [shape: f32[400,16], index: 0, kind: input, shape index: {}]
  %s1 = inlined_call_operand.vmem [shape: bf16[16,128], index: 1, kind: input, shape index: {}]
  %s2 = inlined_call_operand.vmem [shape: f32[1,128], index: 2, kind: input, shape index: {}]
  %s3 = inlined_call_operand.vmem [shape: bf16[128,4], index: 3, kind: input, shape index: {}]
  %s4 = inlined_call_operand.vmem [shape: f32[1,4], index: 4, kind: input, shape index: {}]
  %s5 = inlined_call_operand.vmem [shape: f32[400,4], index: 5, kind: output, shape index: {}]
  %s6 = sld [smem:[#allocation0]]
  $region101: #{tpu_custom_call.1} parent=0
    _
  %s8 = ssub.s32 1, %s6
  %s9 = scalar_select 0, %s8, %s6
  $region1: #{tpu_custom_call.1} parent=0
    #allocation2 [shape = 'u8[212992]{0}', space=vmem, size = 0x34000, scoped, tag = 'output window, operand 0']
    loop: start=0, step=1, limit=4
    $region2: #{tpu_custom_call.1} parent=1 // loop_pre_header
      _
    $region3: #{tpu_custom_call.1} parent=1 // loop_header
      %s11 = sphi 0, %s15
      %p12 = scmp.ge.s32.totalorder %s11, 4
      %s21 = sphi 0, %s23
      %s24 = sphi 0, %s21
      %s25 = sphi 0, %s24
      %s41 = sphi 0, %s25
      %s45 = sphi 0, %s45
      %s47 = sphi 0, %s45
      %s48 = sphi 0, %s47
      %s62 = sphi 0, %s48
      %s66 = sphi 0, %s66
      %s68 = sphi 0, %s66
      %s69 = sphi 0, %s68
      %s83 = sphi 0, %s69
      %s87 = sphi 0, %s87
      %s89 = sphi 0, %s87
      %s90 = sphi 0, %s89
      %s104 = sphi 0, %s90
      %s108 = sphi 0, %s108
      %s110 = sphi 0, %s108
      %s111 = sphi 0, %s110
      %s125 = sphi 0, %s111
      %s131 = sphi 0, %s133
      %s134 = sphi 0, %s131
      %s135 = sphi 0, %s134
      %s151 = sphi 0, %s135
    $region4: #{tpu_custom_call.1} parent=1 // loop_header_branch
      %14 = sbr.rel (%p12) target = $region8
    $region5: #{tpu_custom_call.1} parent=1 // loop_body
      %s16 = ssub.s32 %s11, 1
      %s17 = ssub.s32 %s11, 2
      %s18 = sadd.s32 %s11, 1
      %s19 = ssub.s32 %s11, %s18
      %p20 = scmp.eq.s32.totalorder %s19, 0
      %s22 = sadd.s32 %s21, 1
      %s23 = scalar_select %p20, %s21, %s22
      %p26 = pneg %p20
      %p27 = scmp.eq.s32.totalorder %s11, 1
      %p28 = por %p26, %p27
      %p29 = scmp.ne.s32.totalorder %s21, %s24
      %p30 = scmp.eq.s32.totalorder %s11, 0
      %p31 = por %p29, %p30
      %p32 = scmp.ne.s32.totalorder %s21, %s24
      %p33 = scmp.eq.s32.totalorder %s16, 1
      %p34 = por %p32, %p33
      %p35 = scmp.ne.s32.totalorder %s24, %s25
      %p36 = scmp.eq.s32.totalorder %s16, 0
      %p37 = por %p35, %p36
      %p38 = scmp.ne.s32.totalorder %s24, %s25
      %p39 = scmp.eq.s32.totalorder %s17, 1
      %p40 = por %p38, %p39
      %p42 = scmp.ne.s32.totalorder %s25, %s41
      %p43 = scmp.eq.s32.totalorder %s17, 0
      %p44 = por %p42, %p43
      %s46 = sadd.s32 %s45, 1
      %p49 = scmp.eq.s32.totalorder %s11, 1
      %p50 = scmp.ne.s32.totalorder %s45, %s47
      %p51 = scmp.eq.s32.totalorder %s11, 0
      %p52 = por %p50, %p51
      %p53 = scmp.ne.s32.totalorder %s45, %s47
      %p54 = scmp.eq.s32.totalorder %s16, 1
      %p55 = por %p53, %p54
      %p56 = scmp.ne.s32.totalorder %s47, %s48
      %p57 = scmp.eq.s32.totalorder %s16, 0
      %p58 = por %p56, %p57
      %p59 = scmp.ne.s32.totalorder %s47, %s48
      %p60 = scmp.eq.s32.totalorder %s17, 1
      %p61 = por %p59, %p60
      %p63 = scmp.ne.s32.totalorder %s48, %s62
      %p64 = scmp.eq.s32.totalorder %s17, 0
      %p65 = por %p63, %p64
      %s67 = sadd.s32 %s66, 1
      %p70 = scmp.eq.s32.totalorder %s11, 1
      %p71 = scmp.ne.s32.totalorder %s66, %s68
      %p72 = scmp.eq.s32.totalorder %s11, 0
      %p73 = por %p71, %p72
      %p74 = scmp.ne.s32.totalorder %s66, %s68
      %p75 = scmp.eq.s32.totalorder %s16, 1
      %p76 = por %p74, %p75
      %p77 = scmp.ne.s32.totalorder %s68, %s69
      %p78 = scmp.eq.s32.totalorder %s16, 0
      %p79 = por %p77, %p78
      %p80 = scmp.ne.s32.totalorder %s68, %s69
      %p81 = scmp.eq.s32.totalorder %s17, 1
      %p82 = por %p80, %p81
      %p84 = scmp.ne.s32.totalorder %s69, %s83
      %p85 = scmp.eq.s32.totalorder %s17, 0
      %p86 = por %p84, %p85
      %s88 = sadd.s32 %s87, 1
      %p91 = scmp.eq.s32.totalorder %s11, 1
      %p92 = scmp.ne.s32.totalorder %s87, %s89
      %p93 = scmp.eq.s32.totalorder %s11, 0
      %p94 = por %p92, %p93
      %p95 = scmp.ne.s32.totalorder %s87, %s89
      %p96 = scmp.eq.s32.totalorder %s16, 1
      %p97 = por %p95, %p96
      %p98 = scmp.ne.s32.totalorder %s89, %s90
      %p99 = scmp.eq.s32.totalorder %s16, 0
      %p100 = por %p98, %p99
      %p101 = scmp.ne.s32.totalorder %s89, %s90
      %p102 = scmp.eq.s32.totalorder %s17, 1
      %p103 = por %p101, %p102
      %p105 = scmp.ne.s32.totalorder %s90, %s104
      %p106 = scmp.eq.s32.totalorder %s17, 0
      %p107 = por %p105, %p106
      %s109 = sadd.s32 %s108, 1
      %p112 = scmp.eq.s32.totalorder %s11, 1
      %p113 = scmp.ne.s32.totalorder %s108, %s110
      %p114 = scmp.eq.s32.totalorder %s11, 0
      %p115 = por %p113, %p114
      %p116 = scmp.ne.s32.totalorder %s108, %s110
      %p117 = scmp.eq.s32.totalorder %s16, 1
      %p118 = por %p116, %p117
      %p119 = scmp.ne.s32.totalorder %s110, %s111
      %p120 = scmp.eq.s32.totalorder %s16, 0
      %p121 = por %p119, %p120
      %p122 = scmp.ne.s32.totalorder %s110, %s111
      %p123 = scmp.eq.s32.totalorder %s17, 1
      %p124 = por %p122, %p123
      %p126 = scmp.ne.s32.totalorder %s111, %s125
      %p127 = scmp.eq.s32.totalorder %s17, 0
      %p128 = por %p126, %p127
      %s129 = ssub.s32 %s11, %s18
      %p130 = scmp.eq.s32.totalorder %s129, 0
      %s132 = sadd.s32 %s131, 1
      %s133 = scalar_select %p130, %s131, %s132
      %p136 = pneg %p130
      %p137 = scmp.eq.s32.totalorder %s11, 1
      %p138 = por %p136, %p137
      %p139 = scmp.ne.s32.totalorder %s131, %s134
      %p140 = scmp.eq.s32.totalorder %s11, 0
      %p141 = por %p139, %p140
      %p142 = scmp.ne.s32.totalorder %s131, %s134
      %p143 = scmp.eq.s32.totalorder %s16, 1
      %p144 = por %p142, %p143
      %p145 = scmp.ne.s32.totalorder %s134, %s135
      %p146 = scmp.eq.s32.totalorder %s16, 0
      %p147 = por %p145, %p146
      %p148 = scmp.ne.s32.totalorder %s134, %s135
      %p149 = scmp.eq.s32.totalorder %s17, 1
      %p150 = por %p148, %p149
      %p152 = scmp.ne.s32.totalorder %s135, %s151
      %p153 = scmp.eq.s32.totalorder %s17, 0
      %p154 = por %p152, %p153
      %p155 = scmp.le.s32.totalorder 1, %s11
      %p156 = scmp.lt.s32.totalorder %s11, 3
      %p157 = pnand %p155, %p156
      %p158 = pneg %p157
      // Predicated region
      $region9: #{tpu_custom_call.1} parent=5 // pred_check
        _
      $region10: #{tpu_custom_call.1} parent=5 // pred_check_branch
        %160 = sbr.rel (%p157) target = $region12
      $region11: #{tpu_custom_call.1} parent=5 // pred_region
        %s161 = ssub.s32 %s11, 1
        // Predicated region
        $region13: #{tpu_custom_call.1} parent=11 // pred_check
          %p162 = pneg %p58
        $region14: #{tpu_custom_call.1} parent=11 // pred_check_branch
          %164 = sbr.rel (%p162) target = $region16
        $region15: #{tpu_custom_call.1} parent=11 // pred_region
          _
        $region16: #{tpu_custom_call.1} parent=11 // pred_fallthru
          _
        // Predicated region
        $region17: #{tpu_custom_call.1} parent=11 // pred_check
          %p165 = pneg %p79
        $region18: #{tpu_custom_call.1} parent=11 // pred_check_branch
          %167 = sbr.rel (%p165) target = $region20
        $region19: #{tpu_custom_call.1} parent=11 // pred_region
          _
        $region20: #{tpu_custom_call.1} parent=11 // pred_fallthru
          _
        // Predicated region
        $region21: #{tpu_custom_call.1} parent=11 // pred_check
          %p168 = pneg %p100
        $region22: #{tpu_custom_call.1} parent=11 // pred_check_branch
          %170 = sbr.rel (%p168) target = $region24
        $region23: #{tpu_custom_call.1} parent=11 // pred_region
          _
        $region24: #{tpu_custom_call.1} parent=11 // pred_fallthru
          _
        // Predicated region
        $region25: #{tpu_custom_call.1} parent=11 // pred_check
          %p171 = pneg %p121
        $region26: #{tpu_custom_call.1} parent=11 // pred_check_branch
          %173 = sbr.rel (%p171) target = $region28
        $region27: #{tpu_custom_call.1} parent=11 // pred_region
          _
        $region28: #{tpu_custom_call.1} parent=11 // pred_fallthru
          _
      $region12: #{tpu_custom_call.1} parent=5 // pred_fallthru
        _
      %p174 = scmp.lt.s32.totalorder %s11, 2
      // Predicated region
      $region29: #{tpu_custom_call.1} parent=5 // pred_check
        %p175 = pneg %p174
      $region30: #{tpu_custom_call.1} parent=5 // pred_check_branch
        %177 = sbr.rel (%p175) target = $region32
      $region31: #{tpu_custom_call.1} parent=5 // pred_region
        // Predicated region
        $region33: #{tpu_custom_call.1} parent=31 // pred_check
          %p178 = pneg %p31
        $region34: #{tpu_custom_call.1} parent=31 // pred_check_branch
          %180 = sbr.rel (%p178) target = $region36
        $region35: #{tpu_custom_call.1} parent=31 // pred_region
          %s181 = smul.u32 26, %s11
          %s182 = ssub.s32 50, %s181
          %p183 = scmp.lt.s32.totalorder %s182, 26
          %s184 = scalar_select %p183, %s182, 26
          %s185 = smul.u32 128, %s184
          %p186 = scmp.lt.s32.totalorder %s181, 49
          %s187 = scalar_select %p186, %s181, 49
          %s188 = smul.addr %s187, 8
          %s189 = scalar_lea.vmem %s0, %s188
          %s190 = smul.u32 26, %s11
          %s191 = ssub.s32 50, %s190
          %p192 = scmp.lt.s32.totalorder %s191, 26
          %s193 = scalar_select %p192, %s191, 26
          %s194 = smul.u32 128, %s193
        $region36: #{tpu_custom_call.1} parent=31 // pred_fallthru
          _
      $region32: #{tpu_custom_call.1} parent=5 // pred_fallthru
        _
      %p195 = scmp.le.s32.totalorder 1, %s11
      %p196 = scmp.lt.s32.totalorder %s11, 3
      %p197 = pnand %p195, %p196
      %p198 = pneg %p197
      // Predicated region
      $region37: #{tpu_custom_call.1} parent=5 // pred_check
        _
      $region38: #{tpu_custom_call.1} parent=5 // pred_check_branch
        %200 = sbr.rel (%p197) target = $region40
      $region39: #{tpu_custom_call.1} parent=5 // pred_region
        %s201 = ssub.s32 %s11, 1
        %s202 = smul.u32 26, %s16
        %s203 = ssub.s32 50, %s202
        %p204 = scmp.lt.s32.totalorder %s203, 26
        %s205 = scalar_select %p204, %s203, 26
        %s206 = smul.u32 128, %s205
        %p207 = scmp.lt.s32.totalorder %s202, 49
        %s208 = scalar_select %p207, %s202, 49
        %s209 = smul.addr %s208, 8
        %s210 = scalar_lea.vmem %s0, %s209
        %p211 = pneg %p37
        %p212 = pneg %p34
        %p213 = pneg %p58
        %p214 = pneg %p55
        %p215 = pneg %p79
        %p216 = pneg %p76
        %p217 = pneg %p100
        %p218 = pneg %p97
        %p219 = pneg %p121
        %p220 = pneg %p118
        %p221 = pneg %p147
        %p222 = pneg %p144
        %s223 = sand.u32 %s134, 1
        %s224 = sand.u32 %s134, 1
        %s225 = smul.addr %s224, 208
        %s226 = scalar_lea.vmem [#allocation2], %s225
        %s227 = smul.u32 26, %s16
        %s228 = ssub.s32 50, %s227
        %p229 = scmp.lt.s32.totalorder %s228, 26
        %s230 = scalar_select %p229, %s228, 26
        %s231 = smul.u32 128, %s230
        %p232 = scmp.lt.s32.totalorder %s227, 49
        %s233 = scalar_select %p232, %s227, 49
        %s234 = smul.addr %s233, 8
        %s235 = scalar_lea.vmem %s0, %s234
        %s236 = smul.u32 26, %s16
        %s237 = ssub.s32 50, %s236
        %p238 = scmp.lt.s32.totalorder %s237, 26
        %s239 = scalar_select %p238, %s237, 26
        %s240 = smul.u32 128, %s239
        %s241 = smul.u32 26, %s16
        %s242 = ssub.s32 50, %s241
        %p243 = scmp.lt.s32.totalorder %s242, 26
        %s244 = scalar_select %p243, %s242, 26
        %s245 = smul.u32 128, %s244
        %v247 = vld [vmem:[%s235] sm:$0xff]
        %v248 = vld [vmem:[%s235 + $0x8] sm:$0xff]
        %v249 = vld [vmem:[%s235 + $0x10] sm:$0xff]
        %v250 = vld [vmem:[%s235 + $0x18] sm:$0xff]
        %v251 = vld [vmem:[%s235 + $0x20] sm:$0xff]
        %v252 = vld [vmem:[%s235 + $0x28] sm:$0xff]
        %v253 = vld [vmem:[%s235 + $0x30] sm:$0xff]
        %v254 = vld [vmem:[%s235 + $0x38] sm:$0xff]
        %v255 = vld [vmem:[%s235 + $0x40] sm:$0xff]
        %v256 = vld [vmem:[%s235 + $0x48] sm:$0xff]
        %v257 = vld [vmem:[%s235 + $0x50] sm:$0xff]
        %v258 = vld [vmem:[%s235 + $0x58] sm:$0xff]
        %v259 = vld [vmem:[%s235 + $0x60] sm:$0xff]
        %v260 = vld [vmem:[%s235 + $0x68] sm:$0xff]
        %v261 = vld [vmem:[%s235 + $0x70] sm:$0xff]
        %v262 = vld [vmem:[%s235 + $0x78] sm:$0xff]
        %v263 = vld [vmem:[%s235 + $0x80] sm:$0xff]
        %v264 = vld [vmem:[%s235 + $0x88] sm:$0xff]
        %v265 = vld [vmem:[%s235 + $0x90] sm:$0xff]
        %v266 = vld [vmem:[%s235 + $0x98] sm:$0xff]
        %v267 = vld [vmem:[%s235 + $0xa0] sm:$0xff]
        %v268 = vld [vmem:[%s235 + $0xa8] sm:$0xff]
        %v269 = vld [vmem:[%s235 + $0xb0] sm:$0xff]
        %v270 = vld [vmem:[%s235 + $0xb8] sm:$0xff]
        %v271 = vld [vmem:[%s235 + $0xc0] sm:$0xff]
        %v272 = vld [vmem:[%s235 + $0xc8] sm:$0xff]
        %v273 = vpack.c.bf16 %v248, %v247
        %v274 = vpack.c.bf16 %v250, %v249
        %v275 = vpack.c.bf16 %v252, %v251
        %v276 = vpack.c.bf16 %v254, %v253
        %v277 = vpack.c.bf16 %v256, %v255
        %v278 = vpack.c.bf16 %v258, %v257
        %v279 = vpack.c.bf16 %v260, %v259
        %v280 = vpack.c.bf16 %v262, %v261
        %v281 = vpack.c.bf16 %v264, %v263
        %v282 = vpack.c.bf16 %v266, %v265
        %v283 = vpack.c.bf16 %v268, %v267
        %v284 = vpack.c.bf16 %v270, %v269
        %v285 = vpack.c.bf16 %v272, %v271
        %v286 = vld [vmem:[%s1] sm:$0xf]
        %v287 = vld [vmem:[%s1 + $0x4] sm:$0xf]
        %v288 = vld [vmem:[%s2] sm:$0x1]
        %v290 = vlaneseq
        %v291 = vshrl.u32 %v290, 7
        %v292 = vsub.s32 0, %v291
        %v293 = vrot.slane %v288, %v292
        %v297 = vunpack.c.l.b16 %v286
        %v298 = vunpack.c.l.b16 %v287
        %v299 = vpack.c.b16 %v298, %v297
        %vm301 = vcmask 130048
        %v303 = vsel %vm301, %v273, 0
        %v306 = vsel %vm301, %v274, 0
        %v309 = vsel %vm301, %v275, 0
        %v312 = vsel %vm301, %v276, 0
        %v315 = vsel %vm301, %v277, 0
        %v318 = vsel %vm301, %v278, 0
        %v321 = vsel %vm301, %v279, 0
        %v324 = vsel %vm301, %v280, 0
        %v327 = vsel %vm301, %v281, 0
        %v330 = vsel %vm301, %v282, 0
        %v333 = vsel %vm301, %v283, 0
        %v336 = vsel %vm301, %v284, 0
        %v339 = vsel %vm301, %v285, 0
        %341 = vmatprep.subr.bf16.mxu0 0
        %342 = vmatpush1.bf16.msra.mxu0 0
        %343 = vmatprep.subr.bf16.mxu0 0
        %344 = vmatpush1.bf16.msra.mxu0 0
        %345 = vmatprep.subr.bf16.mxu0 0
        %346 = vmatpush1.bf16.msra.mxu0 0
        %347 = vmatprep.subr.bf16.mxu0 0
        %348 = vmatpush1.bf16.msra.mxu0 0
        %349 = vmatprep.subr.bf16.mxu0 0
        %350 = vmatpush1.bf16.msra.mxu0 0
        %351 = vmatprep.subr.bf16.mxu0 0
        %352 = vmatpush1.bf16.msra.mxu0 0
        %353 = vmatprep.subr.bf16.mxu0 0
        %354 = vmatpush1.bf16.msra.mxu0 0
        %355 = vmatprep.subr.bf16.mxu0 0
        %356 = vmatpush1.bf16.msra.mxu0 %v299
        %357 = vmatprep.subr.bf16.mxu0 0
        %358 = vmatpush2.bf16.msra.mxu0 0
        %359 = vmatprep.subr.bf16.mxu0 0
        %360 = vmatpush2.bf16.msra.mxu0 0
        %361 = vmatprep.subr.bf16.mxu0 0
        %362 = vmatpush2.bf16.msra.mxu0 0
        %363 = vmatprep.subr.bf16.mxu0 0
        %364 = vmatpush2.bf16.msra.mxu0 0
        %365 = vmatprep.subr.bf16.mxu0 0
        %366 = vmatpush2.bf16.msra.mxu0 0
        %367 = vmatprep.subr.bf16.mxu0 0
        %368 = vmatpush2.bf16.msra.mxu0 0
        %369 = vmatprep.subr.bf16.mxu0 0
        %370 = vmatpush2.bf16.msra.mxu0 0
        %371 = vmatprep.subr.bf16.mxu0 0
        %372 = vmatpush2.bf16.msra.mxu0 0
        %373 = vmatprep.mubr.bf16.mxu0 0
        %374 = vmatmul.mubr.bf16.gmra.mxu0 %v303
        %v375 = vpop.f32.mrf.mxu0
        %v376 = vadd.f32 %v293, %v375
        %v377 = vpop.f32.mrf.mxu0
        %v378 = vpop.f32.mrf.mxu0
        %v379 = vadd.f32 %v293, %v378
        %v380 = vpop.f32.mrf.mxu0
        %381 = vmatprep.mubr.bf16.mxu0 0
        %382 = vmatmul.mubr.bf16.gmra.mxu0 %v306
        %v383 = vpop.f32.mrf.mxu0
        %v384 = vadd.f32 %v293, %v383
        %v385 = vpop.f32.mrf.mxu0
        %v386 = vpop.f32.mrf.mxu0
        %v387 = vadd.f32 %v293, %v386
        %v388 = vpop.f32.mrf.mxu0
        %389 = vmatprep.mubr.bf16.mxu0 0
        %390 = vmatmul.mubr.bf16.gmra.mxu0 %v309
        %v391 = vpop.f32.mrf.mxu0
        %v392 = vadd.f32 %v293, %v391
        %v393 = vpop.f32.mrf.mxu0
        %v394 = vpop.f32.mrf.mxu0
        %v395 = vadd.f32 %v293, %v394
        %v396 = vpop.f32.mrf.mxu0
        %397 = vmatprep.mubr.bf16.mxu0 0
        %398 = vmatmul.mubr.bf16.gmra.mxu0 %v312
        %v399 = vpop.f32.mrf.mxu0
        %v400 = vadd.f32 %v293, %v399
        %v401 = vpop.f32.mrf.mxu0
        %v402 = vpop.f32.mrf.mxu0
        %v403 = vadd.f32 %v293, %v402
        %v404 = vpop.f32.mrf.mxu0
        %405 = vmatprep.mubr.bf16.mxu0 0
        %406 = vmatmul.mubr.bf16.gmra.mxu0 %v315
        %v407 = vpop.f32.mrf.mxu0
        %v408 = vadd.f32 %v293, %v407
        %v409 = vpop.f32.mrf.mxu0
        %v410 = vpop.f32.mrf.mxu0
        %v411 = vadd.f32 %v293, %v410
        %v412 = vpop.f32.mrf.mxu0
        %413 = vmatprep.mubr.bf16.mxu0 0
        %414 = vmatmul.mubr.bf16.gmra.mxu0 %v318
        %v415 = vpop.f32.mrf.mxu0
        %v416 = vadd.f32 %v293, %v415
        %v417 = vpop.f32.mrf.mxu0
        %v418 = vpop.f32.mrf.mxu0
        %v419 = vadd.f32 %v293, %v418
        %v420 = vpop.f32.mrf.mxu0
        %421 = vmatprep.mubr.bf16.mxu0 0
        %422 = vmatmul.mubr.bf16.gmra.mxu0 %v321
        %v423 = vpop.f32.mrf.mxu0
        %v424 = vadd.f32 %v293, %v423
        %v425 = vpop.f32.mrf.mxu0
        %v426 = vpop.f32.mrf.mxu0
        %v427 = vadd.f32 %v293, %v426
        %v428 = vpop.f32.mrf.mxu0
        %429 = vmatprep.mubr.bf16.mxu0 0
        %430 = vmatmul.mubr.bf16.gmra.mxu0 %v324
        %v431 = vpop.f32.mrf.mxu0
        %v432 = vadd.f32 %v293, %v431
        %v433 = vpop.f32.mrf.mxu0
        %v434 = vpop.f32.mrf.mxu0
        %v435 = vadd.f32 %v293, %v434
        %v436 = vpop.f32.mrf.mxu0
        %437 = vmatprep.mubr.bf16.mxu0 0
        %438 = vmatmul.mubr.bf16.gmra.mxu0 %v327
        %v439 = vpop.f32.mrf.mxu0
        %v440 = vadd.f32 %v293, %v439
        %v441 = vpop.f32.mrf.mxu0
        %v442 = vpop.f32.mrf.mxu0
        %v443 = vadd.f32 %v293, %v442
        %v444 = vpop.f32.mrf.mxu0
        %445 = vmatprep.mubr.bf16.mxu0 0
        %446 = vmatmul.mubr.bf16.gmra.mxu0 %v330
        %v447 = vpop.f32.mrf.mxu0
        %v448 = vadd.f32 %v293, %v447
        %v449 = vpop.f32.mrf.mxu0
        %v450 = vpop.f32.mrf.mxu0
        %v451 = vadd.f32 %v293, %v450
        %v452 = vpop.f32.mrf.mxu0
        %453 = vmatprep.mubr.bf16.mxu0 0
        %454 = vmatmul.mubr.bf16.gmra.mxu0 %v333
        %v455 = vpop.f32.mrf.mxu0
        %v456 = vadd.f32 %v293, %v455
        %v457 = vpop.f32.mrf.mxu0
        %v458 = vpop.f32.mrf.mxu0
        %v459 = vadd.f32 %v293, %v458
        %v460 = vpop.f32.mrf.mxu0
        %461 = vmatprep.mubr.bf16.mxu0 0
        %462 = vmatmul.mubr.bf16.gmra.mxu0 %v336
        %v463 = vpop.f32.mrf.mxu0
        %v464 = vadd.f32 %v293, %v463
        %v465 = vpop.f32.mrf.mxu0
        %v466 = vpop.f32.mrf.mxu0
        %v467 = vadd.f32 %v293, %v466
        %v468 = vpop.f32.mrf.mxu0
        %469 = vmatprep.mubr.bf16.mxu0 0
        %470 = vmatmul.mubr.bf16.gmra.mxu0 %v339
        %v471 = vpop.f32.mrf.mxu0
        %v472 = vadd.f32 %v293, %v471
        %v473 = vpop.f32.mrf.mxu0
        %v474 = vpop.f32.mrf.mxu0
        %v475 = vadd.f32 %v293, %v474
        %v476 = vpop.f32.mrf.mxu0
        %477 = vdwg.mxu0
        %v478 = vmax.f32 %v376, 0.0
        %v479 = vmax.f32 %v379, 0.0
        %v480 = vmax.f32 %v384, 0.0
        %v481 = vmax.f32 %v387, 0.0
        %v482 = vmax.f32 %v392, 0.0
        %v483 = vmax.f32 %v395, 0.0
        %v484 = vmax.f32 %v400, 0.0
        %v485 = vmax.f32 %v403, 0.0
        %v486 = vmax.f32 %v408, 0.0
        %v487 = vmax.f32 %v411, 0.0
        %v488 = vmax.f32 %v416, 0.0
        %v489 = vmax.f32 %v419, 0.0
        %v490 = vmax.f32 %v424, 0.0
        %v491 = vmax.f32 %v427, 0.0
        %v492 = vmax.f32 %v432, 0.0
        %v493 = vmax.f32 %v435, 0.0
        %v494 = vmax.f32 %v440, 0.0
        %v495 = vmax.f32 %v443, 0.0
        %v496 = vmax.f32 %v448, 0.0
        %v497 = vmax.f32 %v451, 0.0
        %v498 = vmax.f32 %v456, 0.0
        %v499 = vmax.f32 %v459, 0.0
        %v500 = vmax.f32 %v464, 0.0
        %v501 = vmax.f32 %v467, 0.0
        %v502 = vmax.f32 %v472, 0.0
        %v503 = vmax.f32 %v475, 0.0
        %v504 = vpack.c.bf16 %v479, %v478
        %v505 = vpack.c.bf16 %v481, %v480
        %v506 = vpack.c.bf16 %v483, %v482
        %v507 = vpack.c.bf16 %v485, %v484
        %v508 = vpack.c.bf16 %v487, %v486
        %v509 = vpack.c.bf16 %v489, %v488
        %v510 = vpack.c.bf16 %v491, %v490
        %v511 = vpack.c.bf16 %v493, %v492
        %v512 = vpack.c.bf16 %v495, %v494
        %v513 = vpack.c.bf16 %v497, %v496
        %v514 = vpack.c.bf16 %v499, %v498
        %v515 = vpack.c.bf16 %v501, %v500
        %v516 = vpack.c.bf16 %v503, %v502
        %v517 = vld [vmem:[%s3] sm:$0xf]
        %v518 = vld [vmem:[%s3 + $0x4] sm:$0xf]
        %v519 = vld [vmem:[%s3 + $0x8] sm:$0xf]
        %v520 = vld [vmem:[%s3 + $0xc] sm:$0xf]
        %v521 = vld [vmem:[%s3 + $0x10] sm:$0xf]
        %v522 = vld [vmem:[%s3 + $0x14] sm:$0xf]
        %v523 = vld [vmem:[%s3 + $0x18] sm:$0xf]
        %v524 = vld [vmem:[%s3 + $0x1c] sm:$0xf]
        %v525 = vld [vmem:[%s3 + $0x20] sm:$0xf]
        %v526 = vld [vmem:[%s3 + $0x24] sm:$0xf]
        %v527 = vld [vmem:[%s3 + $0x28] sm:$0xf]
        %v528 = vld [vmem:[%s3 + $0x2c] sm:$0xf]
        %v529 = vld [vmem:[%s3 + $0x30] sm:$0xf]
        %v530 = vld [vmem:[%s3 + $0x34] sm:$0xf]
        %v531 = vld [vmem:[%s3 + $0x38] sm:$0xf]
        %v532 = vld [vmem:[%s3 + $0x3c] sm:$0xf]
        %v533 = vld [vmem:[%s4] sm:$0x1]
        %v535 = vlaneseq
        %v536 = vshrl.u32 %v535, 7
        %v537 = vsub.s32 0, %v536
        %v538 = vrot.slane %v533, %v537
        %v556 = vunpack.c.l.b16 %v517
        %v557 = vunpack.c.l.b16 %v518
        %v558 = vunpack.c.l.b16 %v519
        %v559 = vunpack.c.l.b16 %v520
        %v560 = vunpack.c.l.b16 %v521
        %v561 = vunpack.c.l.b16 %v522
        %v562 = vunpack.c.l.b16 %v523
        %v563 = vunpack.c.l.b16 %v524
        %v564 = vunpack.c.l.b16 %v525
        %v565 = vunpack.c.l.b16 %v526
        %v566 = vunpack.c.l.b16 %v527
        %v567 = vunpack.c.l.b16 %v528
        %v568 = vunpack.c.l.b16 %v529
        %v569 = vunpack.c.l.b16 %v530
        %v570 = vunpack.c.l.b16 %v531
        %v571 = vunpack.c.l.b16 %v532
        %v572 = vpack.c.b16 %v557, %v556
        %v573 = vpack.c.b16 %v559, %v558
        %v574 = vpack.c.b16 %v561, %v560
        %v575 = vpack.c.b16 %v563, %v562
        %v576 = vpack.c.b16 %v565, %v564
        %v577 = vpack.c.b16 %v567, %v566
        %v578 = vpack.c.b16 %v569, %v568
        %v579 = vpack.c.b16 %v571, %v570
        %588 = vmatprep.subr.bf16.mxu0 0
        %589 = vmatpush1.bf16.msra.mxu0 %v579
        %590 = vmatprep.subr.bf16.mxu0 0
        %591 = vmatpush1.bf16.msra.mxu0 %v578
        %592 = vmatprep.subr.bf16.mxu0 0
        %593 = vmatpush1.bf16.msra.mxu0 %v577
        %594 = vmatprep.subr.bf16.mxu0 0
        %595 = vmatpush1.bf16.msra.mxu0 %v576
        %596 = vmatprep.subr.bf16.mxu0 0
        %597 = vmatpush1.bf16.msra.mxu0 %v575
        %598 = vmatprep.subr.bf16.mxu0 0
        %599 = vmatpush1.bf16.msra.mxu0 %v574
        %600 = vmatprep.subr.bf16.mxu0 0
        %601 = vmatpush1.bf16.msra.mxu0 %v573
        %602 = vmatprep.subr.bf16.mxu0 0
        %603 = vmatpush1.bf16.msra.mxu0 %v572
        %604 = vmatprep.subr.bf16.mxu0 0
        %605 = vmatpush2.bf16.msra.mxu0 0
        %606 = vmatprep.subr.bf16.mxu0 0
        %607 = vmatpush2.bf16.msra.mxu0 0
        %608 = vmatprep.subr.bf16.mxu0 0
        %609 = vmatpush2.bf16.msra.mxu0 0
        %610 = vmatprep.subr.bf16.mxu0 0
        %611 = vmatpush2.bf16.msra.mxu0 0
        %612 = vmatprep.subr.bf16.mxu0 0
        %613 = vmatpush2.bf16.msra.mxu0 0
        %614 = vmatprep.subr.bf16.mxu0 0
        %615 = vmatpush2.bf16.msra.mxu0 0
        %616 = vmatprep.subr.bf16.mxu0 0
        %617 = vmatpush2.bf16.msra.mxu0 0
        %618 = vmatprep.subr.bf16.mxu0 0
        %619 = vmatpush2.bf16.msra.mxu0 0
        %620 = vmatprep.mubr.bf16.mxu0 0
        %621 = vmatmul.mubr.bf16.gmra.mxu0 %v504
        %v622 = vpop.f32.mrf.mxu0
        %v623 = vadd.f32 %v538, %v622
        %v624 = vpop.f32.mrf.mxu0
        %v625 = vpop.f32.mrf.mxu0
        %v626 = vadd.f32 %v538, %v625
        %v627 = vpop.f32.mrf.mxu0
        %628 = vmatprep.mubr.bf16.mxu0 0
        %629 = vmatmul.mubr.bf16.gmra.mxu0 %v505
        %v630 = vpop.f32.mrf.mxu0
        %v631 = vadd.f32 %v538, %v630
        %v632 = vpop.f32.mrf.mxu0
        %v633 = vpop.f32.mrf.mxu0
        %v634 = vadd.f32 %v538, %v633
        %v635 = vpop.f32.mrf.mxu0
        %636 = vmatprep.mubr.bf16.mxu0 0
        %637 = vmatmul.mubr.bf16.gmra.mxu0 %v506
        %v638 = vpop.f32.mrf.mxu0
        %v639 = vadd.f32 %v538, %v638
        %v640 = vpop.f32.mrf.mxu0
        %v641 = vpop.f32.mrf.mxu0
        %v642 = vadd.f32 %v538, %v641
        %v643 = vpop.f32.mrf.mxu0
        %644 = vmatprep.mubr.bf16.mxu0 0
        %645 = vmatmul.mubr.bf16.gmra.mxu0 %v507
        %v646 = vpop.f32.mrf.mxu0
        %v647 = vadd.f32 %v538, %v646
        %v648 = vpop.f32.mrf.mxu0
        %v649 = vpop.f32.mrf.mxu0
        %v650 = vadd.f32 %v538, %v649
        %v651 = vpop.f32.mrf.mxu0
        %652 = vmatprep.mubr.bf16.mxu0 0
        %653 = vmatmul.mubr.bf16.gmra.mxu0 %v508
        %v654 = vpop.f32.mrf.mxu0
        %v655 = vadd.f32 %v538, %v654
        %v656 = vpop.f32.mrf.mxu0
        %v657 = vpop.f32.mrf.mxu0
        %v658 = vadd.f32 %v538, %v657
        %v659 = vpop.f32.mrf.mxu0
        %660 = vmatprep.mubr.bf16.mxu0 0
        %661 = vmatmul.mubr.bf16.gmra.mxu0 %v509
        %v662 = vpop.f32.mrf.mxu0
        %v663 = vadd.f32 %v538, %v662
        %v664 = vpop.f32.mrf.mxu0
        %v665 = vpop.f32.mrf.mxu0
        %v666 = vadd.f32 %v538, %v665
        %v667 = vpop.f32.mrf.mxu0
        %668 = vmatprep.mubr.bf16.mxu0 0
        %669 = vmatmul.mubr.bf16.gmra.mxu0 %v510
        %v670 = vpop.f32.mrf.mxu0
        %v671 = vadd.f32 %v538, %v670
        %v672 = vpop.f32.mrf.mxu0
        %v673 = vpop.f32.mrf.mxu0
        %v674 = vadd.f32 %v538, %v673
        %v675 = vpop.f32.mrf.mxu0
        %676 = vmatprep.mubr.bf16.mxu0 0
        %677 = vmatmul.mubr.bf16.gmra.mxu0 %v511
        %v678 = vpop.f32.mrf.mxu0
        %v679 = vadd.f32 %v538, %v678
        %v680 = vpop.f32.mrf.mxu0
        %v681 = vpop.f32.mrf.mxu0
        %v682 = vadd.f32 %v538, %v681
        %v683 = vpop.f32.mrf.mxu0
        %684 = vmatprep.mubr.bf16.mxu0 0
        %685 = vmatmul.mubr.bf16.gmra.mxu0 %v512
        %v686 = vpop.f32.mrf.mxu0
        %v687 = vadd.f32 %v538, %v686
        %v688 = vpop.f32.mrf.mxu0
        %v689 = vpop.f32.mrf.mxu0
        %v690 = vadd.f32 %v538, %v689
        %v691 = vpop.f32.mrf.mxu0
        %692 = vmatprep.mubr.bf16.mxu0 0
        %693 = vmatmul.mubr.bf16.gmra.mxu0 %v513
        %v694 = vpop.f32.mrf.mxu0
        %v695 = vadd.f32 %v538, %v694
        %v696 = vpop.f32.mrf.mxu0
        %v697 = vpop.f32.mrf.mxu0
        %v698 = vadd.f32 %v538, %v697
        %v699 = vpop.f32.mrf.mxu0
        %700 = vmatprep.mubr.bf16.mxu0 0
        %701 = vmatmul.mubr.bf16.gmra.mxu0 %v514
        %v702 = vpop.f32.mrf.mxu0
        %v703 = vadd.f32 %v538, %v702
        %v704 = vpop.f32.mrf.mxu0
        %v705 = vpop.f32.mrf.mxu0
        %v706 = vadd.f32 %v538, %v705
        %v707 = vpop.f32.mrf.mxu0
        %708 = vmatprep.mubr.bf16.mxu0 0
        %709 = vmatmul.mubr.bf16.gmra.mxu0 %v515
        %v710 = vpop.f32.mrf.mxu0
        %v711 = vadd.f32 %v538, %v710
        %v712 = vpop.f32.mrf.mxu0
        %v713 = vpop.f32.mrf.mxu0
        %v714 = vadd.f32 %v538, %v713
        %v715 = vpop.f32.mrf.mxu0
        %716 = vmatprep.mubr.bf16.mxu0 0
        %717 = vmatmul.mubr.bf16.gmra.mxu0 %v516
        %v718 = vpop.f32.mrf.mxu0
        %v719 = vadd.f32 %v538, %v718
        %v720 = vpop.f32.mrf.mxu0
        %v721 = vpop.f32.mrf.mxu0
        %v722 = vadd.f32 %v538, %v721
        %v723 = vpop.f32.mrf.mxu0
        %724 = vdwg.mxu0
        %v725 = vtanh.pop %v623
        %v726 = vtanh.pop %v626
        %v727 = vtanh.pop %v631
        %v728 = vtanh.pop %v634
        %v729 = vtanh.pop %v639
        %v730 = vtanh.pop %v642
        %v731 = vtanh.pop %v647
        %v732 = vtanh.pop %v650
        %v733 = vtanh.pop %v655
        %v734 = vtanh.pop %v658
        %v735 = vtanh.pop %v663
        %v736 = vtanh.pop %v666
        %v737 = vtanh.pop %v671
        %v738 = vtanh.pop %v674
        %v739 = vtanh.pop %v679
        %v740 = vtanh.pop %v682
        %v741 = vtanh.pop %v687
        %v742 = vtanh.pop %v690
        %v743 = vtanh.pop %v695
        %v744 = vtanh.pop %v698
        %v745 = vtanh.pop %v703
        %v746 = vtanh.pop %v706
        %v747 = vtanh.pop %v711
        %v748 = vtanh.pop %v714
        %v749 = vtanh.pop %v719
        %v750 = vtanh.pop %v722
        %vm751 = vcmask 31744
        %752 = vst.msk [vmem:[%s226] sm:$0xff] %vm751, %v725
        %753 = vst.msk [vmem:[%s226 + $0x8] sm:$0xff] %vm751, %v726
        %754 = vst.msk [vmem:[%s226 + $0x10] sm:$0xff] %vm751, %v727
        %755 = vst.msk [vmem:[%s226 + $0x18] sm:$0xff] %vm751, %v728
        %756 = vst.msk [vmem:[%s226 + $0x20] sm:$0xff] %vm751, %v729
        %757 = vst.msk [vmem:[%s226 + $0x28] sm:$0xff] %vm751, %v730
        %758 = vst.msk [vmem:[%s226 + $0x30] sm:$0xff] %vm751, %v731
        %759 = vst.msk [vmem:[%s226 + $0x38] sm:$0xff] %vm751, %v732
        %760 = vst.msk [vmem:[%s226 + $0x40] sm:$0xff] %vm751, %v733
        %761 = vst.msk [vmem:[%s226 + $0x48] sm:$0xff] %vm751, %v734
        %762 = vst.msk [vmem:[%s226 + $0x50] sm:$0xff] %vm751, %v735
        %763 = vst.msk [vmem:[%s226 + $0x58] sm:$0xff] %vm751, %v736
        %764 = vst.msk [vmem:[%s226 + $0x60] sm:$0xff] %vm751, %v737
        %765 = vst.msk [vmem:[%s226 + $0x68] sm:$0xff] %vm751, %v738
        %766 = vst.msk [vmem:[%s226 + $0x70] sm:$0xff] %vm751, %v739
        %767 = vst.msk [vmem:[%s226 + $0x78] sm:$0xff] %vm751, %v740
        %768 = vst.msk [vmem:[%s226 + $0x80] sm:$0xff] %vm751, %v741
        %769 = vst.msk [vmem:[%s226 + $0x88] sm:$0xff] %vm751, %v742
        %770 = vst.msk [vmem:[%s226 + $0x90] sm:$0xff] %vm751, %v743
        %771 = vst.msk [vmem:[%s226 + $0x98] sm:$0xff] %vm751, %v744
        %772 = vst.msk [vmem:[%s226 + $0xa0] sm:$0xff] %vm751, %v745
        %773 = vst.msk [vmem:[%s226 + $0xa8] sm:$0xff] %vm751, %v746
        %774 = vst.msk [vmem:[%s226 + $0xb0] sm:$0xff] %vm751, %v747
        %775 = vst.msk [vmem:[%s226 + $0xb8] sm:$0xff] %vm751, %v748
        %776 = vst.msk [vmem:[%s226 + $0xc0] sm:$0xff] %vm751, %v749
        %777 = vst.msk [vmem:[%s226 + $0xc8] sm:$0xff] %vm751, %v750
        %s778 = sand.u32 %s134, 1
        %s779 = sand.u32 %s134, 1
        %s780 = smul.addr %s779, 208
        %s781 = scalar_lea.vmem [#allocation2], %s780
        // Predicated region
        $region41: #{tpu_custom_call.1} parent=39 // pred_check
          %p782 = pneg %p144
        $region42: #{tpu_custom_call.1} parent=39 // pred_check_branch
          %784 = sbr.rel (%p782) target = $region44
        $region43: #{tpu_custom_call.1} parent=39 // pred_region
          %s785 = smul.u32 26, %s16
          %s786 = ssub.s32 50, %s785
          %p787 = scmp.lt.s32.totalorder %s786, 26
          %s788 = scalar_select %p787, %s786, 26
          %s789 = smul.u32 128, %s788
          %p790 = scmp.ne.s32.totalorder 0, %s789
          %s791 = smul.addr %s785, 8
          %s792 = scalar_lea.vmem %s5, %s791
          // Predicated region
          $region45: #{tpu_custom_call.1} parent=43 // pred_check
            %p793 = pneg %p790
          $region46: #{tpu_custom_call.1} parent=43 // pred_check_branch
            %795 = sbr.rel (%p793) target = $region48
          $region47: #{tpu_custom_call.1} parent=43 // pred_region
            // Predicated region
            $region49: #{tpu_custom_call.1} parent=47 // pred_check
              _
            $region50: #{tpu_custom_call.1} parent=47 // pred_check_branch
              %797 = sbr.rel (0) target = $region52
            $region51: #{tpu_custom_call.1} parent=47 // pred_region
              // Predicated region
              $region71: #{tpu_custom_call.1} parent=51 // pred_check
                _
              $region72: #{tpu_custom_call.1} parent=51 // pred_check_branch
                %898 = sbr.rel (0) target = $region74
              $region73: #{tpu_custom_call.1} parent=51 // pred_region
                %s899 = sdiv.u32.pop %s788, 26
                %s900 = srem.u32.pop %s788, 26
                // While loop
                $region75: #{tpu_custom_call.1} parent=73 // loop_pre_header
                  _
                $region76: #{tpu_custom_call.1} parent=73 // loop_header
                  %s902 = sphi 0, %s904
                  %p903 = scmp.ge.s32.totalorder %s902, %s899
                  %s907 = sphi 0, %s964
                  %s908 = sphi %s781, %s967
                  %s909 = sphi %s792, %s968
                $region77: #{tpu_custom_call.1} parent=73 // loop_header_branch
                  %906 = sbr.rel (%p903) target = $region81
                $region78: #{tpu_custom_call.1} parent=73 // loop_body
                  %v910 = vld [vmem:[%s908] sm:$0xff]
                  %911 = vst [vmem:[%s909] sm:$0xff] %v910
                  %v912 = vld [vmem:[%s908 + $0x8] sm:$0xff]
                  %913 = vst [vmem:[%s909 + $0x8] sm:$0xff] %v912
                  %v914 = vld [vmem:[%s908 + $0x10] sm:$0xff]
                  %915 = vst [vmem:[%s909 + $0x10] sm:$0xff] %v914
                  %v916 = vld [vmem:[%s908 + $0x18] sm:$0xff]
                  %917 = vst [vmem:[%s909 + $0x18] sm:$0xff] %v916
                  %v918 = vld [vmem:[%s908 + $0x20] sm:$0xff]
                  %919 = vst [vmem:[%s909 + $0x20] sm:$0xff] %v918
                  %v920 = vld [vmem:[%s908 + $0x28] sm:$0xff]
                  %921 = vst [vmem:[%s909 + $0x28] sm:$0xff] %v920
                  %v922 = vld [vmem:[%s908 + $0x30] sm:$0xff]
                  %923 = vst [vmem:[%s909 + $0x30] sm:$0xff] %v922
                  %v924 = vld [vmem:[%s908 + $0x38] sm:$0xff]
                  %925 = vst [vmem:[%s909 + $0x38] sm:$0xff] %v924
                  %v926 = vld [vmem:[%s908 + $0x40] sm:$0xff]
                  %927 = vst [vmem:[%s909 + $0x40] sm:$0xff] %v926
                  %v928 = vld [vmem:[%s908 + $0x48] sm:$0xff]
                  %929 = vst [vmem:[%s909 + $0x48] sm:$0xff] %v928
                  %v930 = vld [vmem:[%s908 + $0x50] sm:$0xff]
                  %931 = vst [vmem:[%s909 + $0x50] sm:$0xff] %v930
                  %v932 = vld [vmem:[%s908 + $0x58] sm:$0xff]
                  %933 = vst [vmem:[%s909 + $0x58] sm:$0xff] %v932
                  %v934 = vld [vmem:[%s908 + $0x60] sm:$0xff]
                  %935 = vst [vmem:[%s909 + $0x60] sm:$0xff] %v934
                  %v936 = vld [vmem:[%s908 + $0x68] sm:$0xff]
                  %937 = vst [vmem:[%s909 + $0x68] sm:$0xff] %v936
                  %v938 = vld [vmem:[%s908 + $0x70] sm:$0xff]
                  %939 = vst [vmem:[%s909 + $0x70] sm:$0xff] %v938
                  %v940 = vld [vmem:[%s908 + $0x78] sm:$0xff]
                  %941 = vst [vmem:[%s909 + $0x78] sm:$0xff] %v940
                  %v942 = vld [vmem:[%s908 + $0x80] sm:$0xff]
                  %943 = vst [vmem:[%s909 + $0x80] sm:$0xff] %v942
                  %v944 = vld [vmem:[%s908 + $0x88] sm:$0xff]
                  %945 = vst [vmem:[%s909 + $0x88] sm:$0xff] %v944
                  %v946 = vld [vmem:[%s908 + $0x90] sm:$0xff]
                  %947 = vst [vmem:[%s909 + $0x90] sm:$0xff] %v946
                  %v948 = vld [vmem:[%s908 + $0x98] sm:$0xff]
                  %949 = vst [vmem:[%s909 + $0x98] sm:$0xff] %v948
                  %v950 = vld [vmem:[%s908 + $0xa0] sm:$0xff]
                  %951 = vst [vmem:[%s909 + $0xa0] sm:$0xff] %v950
                  %v952 = vld [vmem:[%s908 + $0xa8] sm:$0xff]
                  %953 = vst [vmem:[%s909 + $0xa8] sm:$0xff] %v952
                  %v954 = vld [vmem:[%s908 + $0xb0] sm:$0xff]
                  %955 = vst [vmem:[%s909 + $0xb0] sm:$0xff] %v954
                  %v956 = vld [vmem:[%s908 + $0xb8] sm:$0xff]
                  %957 = vst [vmem:[%s909 + $0xb8] sm:$0xff] %v956
                  %v958 = vld [vmem:[%s908 + $0xc0] sm:$0xff]
                  %959 = vst [vmem:[%s909 + $0xc0] sm:$0xff] %v958
                  %v960 = vld [vmem:[%s908 + $0xc8] sm:$0xff]
                  %961 = vst [vmem:[%s909 + $0xc8] sm:$0xff] %v960
                  %s962 = sadd.s32 1, %s907
                  %p963 = scmp.ge.s32.totalorder %s962, %s899
                  %s964 = scalar_select %p963, 0, %s962
                  %s965 = smul.u32 %s964, 208
                  %s966 = smul.u32 %s964, 208
                  %s967 = scalar_lea.vmem %s781, %s965 [#allocation2]
                  %s968 = scalar_lea.vmem %s792, %s966
                $region79: #{tpu_custom_call.1} parent=73 // loop_footer
                  %s904 = sadd.s32 %s902, 1
                $region80: #{tpu_custom_call.1} parent=73 // loop_footer_branch
                  %901 = sbr.rel target = $region76
                $region81: #{tpu_custom_call.1} parent=73 // loop_exit
                  _
                %s969 = sdiv.u32.pop %s788, 26
                %s970 = srem.u32.pop %s788, 26
                %s971 = smul.u32 %s969, 26
                %s972 = smul.u32 8, %s971
                %s973 = scalar_lea.vmem %s781, %s972 [#allocation2]
                %s974 = smul.u32 8, %s971
                %s975 = scalar_lea.vmem %s792, %s974
                // While loop
                $region82: #{tpu_custom_call.1} parent=73 // loop_pre_header
                  _
                $region83: #{tpu_custom_call.1} parent=73 // loop_header
                  %s977 = sphi 0, %s979
                  %p978 = scmp.ge.s32.totalorder %s977, %s970
                  %s982 = sphi 0, %s989
                  %s983 = sphi %s973, %s992
                  %s984 = sphi %s975, %s993
                $region84: #{tpu_custom_call.1} parent=73 // loop_header_branch
                  %981 = sbr.rel (%p978) target = $region88
                $region85: #{tpu_custom_call.1} parent=73 // loop_body
                  %v985 = vld [vmem:[%s983] sm:$0xff]
                  %986 = vst [vmem:[%s984] sm:$0xff] %v985
                  %s987 = sadd.s32 1, %s982
                  %p988 = scmp.ge.s32.totalorder %s987, %s970
                  %s989 = scalar_select %p988, 0, %s987
                  %s990 = smul.u32 %s989, 8
                  %s991 = smul.u32 %s989, 8
                  %s992 = scalar_lea.vmem %s973, %s990 [#allocation2]
                  %s993 = scalar_lea.vmem %s975, %s991
                $region86: #{tpu_custom_call.1} parent=73 // loop_footer
                  %s979 = sadd.s32 %s977, 1
                $region87: #{tpu_custom_call.1} parent=73 // loop_footer_branch
                  %976 = sbr.rel target = $region83
                $region88: #{tpu_custom_call.1} parent=73 // loop_exit
                  _
              $region74: #{tpu_custom_call.1} parent=51 // pred_fallthru
                _
              // Predicated region
              $region89: #{tpu_custom_call.1} parent=51 // pred_check
                _
              $region90: #{tpu_custom_call.1} parent=51 // pred_check_branch
                %995 = sbr.rel target = $region92
              $region91: #{tpu_custom_call.1} parent=51 // pred_region
                _
              $region92: #{tpu_custom_call.1} parent=51 // pred_fallthru
                _
            $region52: #{tpu_custom_call.1} parent=47 // pred_fallthru
              _
            // Predicated region
            $region53: #{tpu_custom_call.1} parent=47 // pred_check
              _
            $region54: #{tpu_custom_call.1} parent=47 // pred_check_branch
              %799 = sbr.rel target = $region56
            $region55: #{tpu_custom_call.1} parent=47 // pred_region
              %s801 = ssub.s32 256, 1
              %s802 = sdiv.u32.pop %s788, 26
              %s803 = srem.u32.pop %s788, 26
              // While loop
              $region57: #{tpu_custom_call.1} parent=55 // loop_pre_header
                _
              $region58: #{tpu_custom_call.1} parent=55 // loop_header
                %s805 = sphi 0, %s807
                %p806 = scmp.ge.s32.totalorder %s805, %s802
                %s810 = sphi 0, %s867
                %s811 = sphi %s781, %s870
                %s812 = sphi %s792, %s871
              $region59: #{tpu_custom_call.1} parent=55 // loop_header_branch
                %809 = sbr.rel (%p806) target = $region63
              $region60: #{tpu_custom_call.1} parent=55 // loop_body
                %v813 = vld [vmem:[%s811] sm:%s801]
                %814 = vst [vmem:[%s812] sm:%s801] %v813
                %v815 = vld [vmem:[%s811 + $0x8] sm:%s801]
                %816 = vst [vmem:[%s812 + $0x8] sm:%s801] %v815
                %v817 = vld [vmem:[%s811 + $0x10] sm:%s801]
                %818 = vst [vmem:[%s812 + $0x10] sm:%s801] %v817
                %v819 = vld [vmem:[%s811 + $0x18] sm:%s801]
                %820 = vst [vmem:[%s812 + $0x18] sm:%s801] %v819
                %v821 = vld [vmem:[%s811 + $0x20] sm:%s801]
                %822 = vst [vmem:[%s812 + $0x20] sm:%s801] %v821
                %v823 = vld [vmem:[%s811 + $0x28] sm:%s801]
                %824 = vst [vmem:[%s812 + $0x28] sm:%s801] %v823
                %v825 = vld [vmem:[%s811 + $0x30] sm:%s801]
                %826 = vst [vmem:[%s812 + $0x30] sm:%s801] %v825
                %v827 = vld [vmem:[%s811 + $0x38] sm:%s801]
                %828 = vst [vmem:[%s812 + $0x38] sm:%s801] %v827
                %v829 = vld [vmem:[%s811 + $0x40] sm:%s801]
                %830 = vst [vmem:[%s812 + $0x40] sm:%s801] %v829
                %v831 = vld [vmem:[%s811 + $0x48] sm:%s801]
                %832 = vst [vmem:[%s812 + $0x48] sm:%s801] %v831
                %v833 = vld [vmem:[%s811 + $0x50] sm:%s801]
                %834 = vst [vmem:[%s812 + $0x50] sm:%s801] %v833
                %v835 = vld [vmem:[%s811 + $0x58] sm:%s801]
                %836 = vst [vmem:[%s812 + $0x58] sm:%s801] %v835
                %v837 = vld [vmem:[%s811 + $0x60] sm:%s801]
                %838 = vst [vmem:[%s812 + $0x60] sm:%s801] %v837
                %v839 = vld [vmem:[%s811 + $0x68] sm:%s801]
                %840 = vst [vmem:[%s812 + $0x68] sm:%s801] %v839
                %v841 = vld [vmem:[%s811 + $0x70] sm:%s801]
                %842 = vst [vmem:[%s812 + $0x70] sm:%s801] %v841
                %v843 = vld [vmem:[%s811 + $0x78] sm:%s801]
                %844 = vst [vmem:[%s812 + $0x78] sm:%s801] %v843
                %v845 = vld [vmem:[%s811 + $0x80] sm:%s801]
                %846 = vst [vmem:[%s812 + $0x80] sm:%s801] %v845
                %v847 = vld [vmem:[%s811 + $0x88] sm:%s801]
                %848 = vst [vmem:[%s812 + $0x88] sm:%s801] %v847
                %v849 = vld [vmem:[%s811 + $0x90] sm:%s801]
                %850 = vst [vmem:[%s812 + $0x90] sm:%s801] %v849
                %v851 = vld [vmem:[%s811 + $0x98] sm:%s801]
                %852 = vst [vmem:[%s812 + $0x98] sm:%s801] %v851
                %v853 = vld [vmem:[%s811 + $0xa0] sm:%s801]
                %854 = vst [vmem:[%s812 + $0xa0] sm:%s801] %v853
                %v855 = vld [vmem:[%s811 + $0xa8] sm:%s801]
                %856 = vst [vmem:[%s812 + $0xa8] sm:%s801] %v855
                %v857 = vld [vmem:[%s811 + $0xb0] sm:%s801]
                %858 = vst [vmem:[%s812 + $0xb0] sm:%s801] %v857
                %v859 = vld [vmem:[%s811 + $0xb8] sm:%s801]
                %860 = vst [vmem:[%s812 + $0xb8] sm:%s801] %v859
                %v861 = vld [vmem:[%s811 + $0xc0] sm:%s801]
                %862 = vst [vmem:[%s812 + $0xc0] sm:%s801] %v861
                %v863 = vld [vmem:[%s811 + $0xc8] sm:%s801]
                %864 = vst [vmem:[%s812 + $0xc8] sm:%s801] %v863
                %s865 = sadd.s32 1, %s810
                %p866 = scmp.ge.s32.totalorder %s865, %s802
                %s867 = scalar_select %p866, 0, %s865
                %s868 = smul.u32 %s867, 208
                %s869 = smul.u32 %s867, 208
                %s870 = scalar_lea.vmem %s781, %s868 [#allocation2]
                %s871 = scalar_lea.vmem %s792, %s869
              $region61: #{tpu_custom_call.1} parent=55 // loop_footer
                %s807 = sadd.s32 %s805, 1
              $region62: #{tpu_custom_call.1} parent=55 // loop_footer_branch
                %804 = sbr.rel target = $region58
              $region63: #{tpu_custom_call.1} parent=55 // loop_exit
                _
              %s872 = sdiv.u32.pop %s788, 26
              %s873 = srem.u32.pop %s788, 26
              %s874 = smul.u32 %s872, 26
              %s875 = smul.u32 8, %s874
              %s876 = scalar_lea.vmem %s781, %s875 [#allocation2]
              %s877 = smul.u32 8, %s874
              %s878 = scalar_lea.vmem %s792, %s877
              // While loop
              $region64: #{tpu_custom_call.1} parent=55 // loop_pre_header
                _
              $region65: #{tpu_custom_call.1} parent=55 // loop_header
                %s880 = sphi 0, %s882
                %p881 = scmp.ge.s32.totalorder %s880, %s873
                %s885 = sphi 0, %s892
                %s886 = sphi %s876, %s895
                %s887 = sphi %s878, %s896
              $region66: #{tpu_custom_call.1} parent=55 // loop_header_branch
                %884 = sbr.rel (%p881) target = $region70
              $region67: #{tpu_custom_call.1} parent=55 // loop_body
                %v888 = vld [vmem:[%s886] sm:%s801]
                %889 = vst [vmem:[%s887] sm:%s801] %v888
                %s890 = sadd.s32 1, %s885
                %p891 = scmp.ge.s32.totalorder %s890, %s873
                %s892 = scalar_select %p891, 0, %s890
                %s893 = smul.u32 %s892, 8
                %s894 = smul.u32 %s892, 8
                %s895 = scalar_lea.vmem %s876, %s893 [#allocation2]
                %s896 = scalar_lea.vmem %s878, %s894
              $region68: #{tpu_custom_call.1} parent=55 // loop_footer
                %s882 = sadd.s32 %s880, 1
              $region69: #{tpu_custom_call.1} parent=55 // loop_footer_branch
                %879 = sbr.rel target = $region65
              $region70: #{tpu_custom_call.1} parent=55 // loop_exit
                _
            $region56: #{tpu_custom_call.1} parent=47 // pred_fallthru
              _
          $region48: #{tpu_custom_call.1} parent=43 // pred_fallthru
            _
          %996 = vnop
        $region44: #{tpu_custom_call.1} parent=39 // pred_fallthru
          _
      $region40: #{tpu_custom_call.1} parent=5 // pred_fallthru
        _
      %p997 = scmp.le.s32.totalorder 2, %s11
      // Predicated region
      $region93: #{tpu_custom_call.1} parent=5 // pred_check
        %p998 = pneg %p997
      $region94: #{tpu_custom_call.1} parent=5 // pred_check_branch
        %1000 = sbr.rel (%p998) target = $region96
      $region95: #{tpu_custom_call.1} parent=5 // pred_region
        %s1001 = ssub.s32 %s11, 2
        // Predicated region
        $region97: #{tpu_custom_call.1} parent=95 // pred_check
          %p1002 = pneg %p150
        $region98: #{tpu_custom_call.1} parent=95 // pred_check_branch
          %1004 = sbr.rel (%p1002) target = $region100
        $region99: #{tpu_custom_call.1} parent=95 // pred_region
          %s1005 = sand.u32 %s135, 1
          %s1006 = sand.u32 %s135, 1
          %s1007 = smul.addr %s1006, 208
          %s1008 = scalar_lea.vmem [#allocation2], %s1007
        $region100: #{tpu_custom_call.1} parent=95 // pred_fallthru
          _
      $region96: #{tpu_custom_call.1} parent=5 // pred_fallthru
        _
    $region6: #{tpu_custom_call.1} parent=1 // loop_footer
      %s15 = sadd.s32 1, %s11
    $region7: #{tpu_custom_call.1} parent=1 // loop_footer_branch
      %10 = sbr.rel target = $region3
    $region8: #{tpu_custom_call.1} parent=1 // loop_exit
      _

</llo_original>
